<compile_context>
chip_gen: v5e
topology: v5e:2x2
jax: 0.10.0
libtpu: 0.0.40
codegen_flags: <defaults>
</compile_context>

<pallas_src>
import functools

import jax
import jax.numpy as jnp
from jax import lax
from jax.experimental import pallas as pl
from jax.experimental.pallas import tpu as pltpu


_LANES = 128
_CHUNK_ROWS = 1024  # multiple of 8*128: dynamic sublane offsets stay tile-aligned


def _round_up(n, m):
    return ((n + m - 1) // m) * m


def _vmem_capacity_bytes():
    """Physical VMEM of the attached TPU; conservative 64 MiB (v7x) fallback."""
    try:
        return int(pltpu.get_tpu_info().vmem_capacity_bytes)
    except Exception:
        return 64 * 1024 * 1024


def fused_mlp_kernel(x_ref, w_ref, b_ref, o_ref, *, chunk, num_chunks):
    """y = sigmoid(x @ w + b) for one batch tile.

    x_ref: (TB, F) VMEM      w_ref: (1, F) VMEM (grid-resident)
    b_ref: (1, 1)  SMEM      o_ref: (1, TB//128, 128) VMEM (lane-dense rows)
    """
    w_row = w_ref[...]          # (1, F) -- hoisted out of the chunk loop
    bias = b_ref[0, 0]          # scalar read from SMEM

    nsub = chunk // _LANES      # sublane rows written per chunk

    if num_chunks == 1:
        # Whole tile in one shot (small TB); no dynamic slicing needed.
        s = jnp.sum(x_ref[...] * w_row, axis=-1)                  # (TB,)
        y = jax.nn.sigmoid(s + bias)
        o_ref[0, :, :] = y.reshape(o_ref.shape[1], _LANES).astype(o_ref.dtype)
    else:
        def body(c, carry):
            r0 = pl.multiple_of(c * chunk, chunk)                 # row offset
            s0 = pl.multiple_of(c * nsub, nsub)                   # sublane offset
            xc = x_ref[pl.ds(r0, chunk), :]                       # (chunk, F)
            s = jnp.sum(xc * w_row, axis=-1)                      # (chunk,) lane reduce
            y = jax.nn.sigmoid(s + bias)
            # Lane-dense store: (chunk,) -> (chunk/128, 128) dense vregs.
            o_ref[0, pl.ds(s0, nsub), :] = (
                y.reshape(nsub, _LANES).astype(o_ref.dtype))
            return carry

        lax.fori_loop(0, num_chunks, body, None)


def mlp_forward(x, w1, b1, w2, b2):
    """Forward pass of Linear(n_in, 10) -> Linear(10, 1) -> sigmoid."""
    x = x.astype(jnp.float32)
    B, F = x.shape

    # --- Fold the two linear layers into one affine map (host-side, tiny). ---
    w_fused = (w1 @ w2).astype(jnp.float32).reshape(1, F)     # (1, n_in)
    b_fused = (b1 @ w2 + b2).astype(jnp.float32).reshape(1, 1)

    # --- Batch tile sizing from the chip's physical VMEM ---------------------
    vmem_cap = _vmem_capacity_bytes()
    # Per-buffer x tile: <= VMEM/16 and <= 8 MiB (double-buffered => <= VMEM/8).
    x_tile_budget = max(1 << 20, min(vmem_cap // 16, 8 << 20))
    row_bytes = F * 4
    tb_budget = max(_LANES, (x_tile_budget // row_bytes) // _LANES * _LANES)

    b_pad = _round_up(B, _LANES)
    if b_pad <= tb_budget:
        if b_pad >= 2 * _CHUNK_ROWS:
            # Whole batch would fit in one tile: split so the grid has >=2
            # steps and the "parallel" axis can use both v7x TensorCores.
            TB = _round_up((b_pad + 1) // 2, _LANES)
        else:
            TB = b_pad
    else:
        TB = tb_budget

    if TB >= _CHUNK_ROWS:
        TB = (TB // _CHUNK_ROWS) * _CHUNK_ROWS
        chunk = _CHUNK_ROWS
    else:
        chunk = TB
    num_chunks = TB // chunk

    # Only tiny batches (B < 2*_CHUNK_ROWS, not a multiple of 128) ever get
    # padded, and by < 128 rows.  Large x is never copied; ragged last tiles
    # are handled by Pallas' block clamping and sliced off below.
    if B < TB:
        x = jnp.pad(x, ((0, TB - B), (0, 0)))

    num_tiles = pl.cdiv(B, TB)

    # --- Explicit VMEM budget for the compiler (v5e 16 MiB / v7x 32 MiB scoped
    #     defaults would otherwise throttle the bigger tiles). -----------------
    need = (2 * TB * row_bytes      # double-buffered x tiles
            + 2 * TB * 4            # double-buffered lane-dense output tiles
            + 4 * F * 4             # fused weight row
            + chunk * row_bytes     # x*w intermediate inside the chunk loop
            + (2 << 20))            # headroom
    vmem_limit = int(min(int(0.75 * vmem_cap), max(need, 32 << 20)))

    cost = pl.CostEstimate(
        flops=2 * B * F + B,
        transcendentals=B,                              # one sigmoid per row
        bytes_accessed=B * row_bytes + B * 4 + F * 4 + 4,
    )

    kernel = functools.partial(fused_mlp_kernel, chunk=chunk, num_chunks=num_chunks)

    out = pl.pallas_call(
        kernel,
        out_shape=jax.ShapeDtypeStruct((num_tiles, TB // _LANES, _LANES), jnp.float32),
        grid=(num_tiles,),
        in_specs=[
            pl.BlockSpec((TB, F), lambda i: (i, 0)),               # x: tiled batch
            pl.BlockSpec((1, F), lambda i: (0, 0)),                # fused weight (resident)
            pl.BlockSpec(memory_space=pltpu.MemorySpace.SMEM),     # fused bias scalar
        ],
        out_specs=pl.BlockSpec((1, TB // _LANES, _LANES), lambda i: (i, 0, 0)),
        compiler_params=pltpu.CompilerParams(
            dimension_semantics=("parallel",),                     # shard batch over TCs
            vmem_limit_bytes=vmem_limit,
        ),
        cost_estimate=cost,
    )(x, w_fused, b_fused)

    # Lane-dense (num_tiles, TB/128, 128) -> flat -> (B, 1); reshape is free.
    return out.reshape(num_tiles * TB)[:B].reshape(B, 1)


if __name__ == "__main__":
    key = jax.random.PRNGKey(0)
    batch = 8
    n_input_features = 32
    hidden = 10

    k_x, k_w1, k_b1, k_w2, k_b2 = jax.random.split(key, 5)

    # Deterministic parameter init (PyTorch-style uniform bounds).
    bound1 = 1.0 / jnp.sqrt(n_input_features)
    w1 = jax.random.uniform(k_w1, (n_input_features, hidden),
                            minval=-bound1, maxval=bound1, dtype=jnp.float32)
    b1 = jax.random.uniform(k_b1, (1, hidden),
                            minval=-bound1, maxval=bound1, dtype=jnp.float32)

    bound2 = 1.0 / jnp.sqrt(hidden)
    w2 = jax.random.uniform(k_w2, (hidden, 1),
                            minval=-bound2, maxval=bound2, dtype=jnp.float32)
    b2 = jax.random.uniform(k_b2, (1, 1),
                            minval=-bound2, maxval=bound2, dtype=jnp.float32)

    x = jax.random.normal(k_x, (batch, n_input_features), dtype=jnp.float32)

    out = mlp_forward(x, w1, b1, w2, b2)
    jax.block_until_ready(out)

    # Pure-JAX reference of the ORIGINAL two-layer forward.
    ref = jax.nn.sigmoid((x @ w1 + b1) @ w2 + b2)
    assert out.shape == (batch, 1)
    assert jnp.allclose(out, ref, atol=1e-5), "mismatch vs reference"

    print("KERNEL_OK")
</pallas_src>

<mosaic_0001>
module attributes {stable_mosaic.version = 11 : i64} {
  func.func @fused_mlp_kernel(%arg0: i32, %arg1: memref<128x32xf32, #tpu.memory_space<vmem>>, %arg2: memref<1x32xf32, #tpu.memory_space<vmem>>, %arg3: memref<1x1xf32, #tpu.memory_space<smem>>, %arg4: memref<1x1x128xf32, #tpu.memory_space<vmem>>) attributes {dimension_semantics = [#tpu.dimension_semantics<parallel>], iteration_bounds = array<i64: 1>, scalar_prefetch = 0 : i64, scratch_operands = 0 : i64, tpu.core_type = #tpu.core_type<tc>, window_params = [{transform_indices = @transform_0, window_bounds = array<i64: 128, 32>}, {pipeline_mode = #tpu.pipeline_mode<synchronous>, transform_indices = @transform_1, window_bounds = array<i64: 1, 32>}, {transform_indices = @transform_2, window_bounds = array<i64: 1, 1>}, {transform_indices = @transform_3, window_bounds = array<i64: 1, 1, 128>}]} {
    %c0 = arith.constant 0 : index
    %c0_0 = arith.constant 0 : index
    %0 = vector.load %arg2[%c0, %c0_0] : memref<1x32xf32, #tpu.memory_space<vmem>>, vector<1x32xf32>
    %c0_1 = arith.constant 0 : index
    %c0_2 = arith.constant 0 : index
    %1 = memref.load %arg3[%c0_1, %c0_2] : memref<1x1xf32, #tpu.memory_space<smem>>
    %c0_3 = arith.constant 0 : index
    %c0_4 = arith.constant 0 : index
    %2 = vector.load %arg1[%c0_3, %c0_4] : memref<128x32xf32, #tpu.memory_space<vmem>>, vector<128x32xf32>
    %3 = vector.broadcast %0 : vector<1x32xf32> to vector<128x32xf32>
    %4 = arith.mulf %2, %3 : vector<128x32xf32>
    %cst = arith.constant dense<0.000000e+00> : vector<128xf32>
    %5 = vector.multi_reduction <add>, %4, %cst [1] : vector<128x32xf32> to vector<128xf32>
    %6 = vector.broadcast %1 : f32 to vector<128xf32>
    %7 = arith.addf %5, %6 : vector<128xf32>
    %8 = arith.negf %7 : vector<128xf32>
    %9 = math.exp %8 : vector<128xf32>
    %cst_5 = arith.constant 1.000000e+00 : f32
    %10 = vector.broadcast %cst_5 : f32 to vector<128xf32>
    %11 = arith.addf %10, %9 : vector<128xf32>
    %12 = arith.divf %10, %11 : vector<128xf32>
    %13 = vector.shape_cast %12 : vector<128xf32> to vector<1x128xf32>
    %c0_6 = arith.constant 0 : index
    %c0_7 = arith.constant 0 : index
    %c0_8 = arith.constant 0 : index
    %14 = vector.load %arg4[%c0_6, %c0_7, %c0_8] : memref<1x1x128xf32, #tpu.memory_space<vmem>>, vector<1x1x128xf32>
    %15 = vector.shape_cast %14 : vector<1x1x128xf32> to vector<1x128xf32>
    %16 = vector.shape_cast %13 : vector<1x128xf32> to vector<1x1x128xf32>
    tpu.vector_store %arg4[%c0_6, %c0_7, %c0_8], %16 {strides = array<i32>} : memref<1x1x128xf32, #tpu.memory_space<vmem>>, vector<1x1x128xf32>,
    return
  }
  func.func @transform_0(%arg0: i32) -> (i32, i32) {
    %c0_i32 = arith.constant 0 : i32
    %c0_i32_0 = arith.constant 0 : i32
    return %arg0, %c0_i32 : i32, i32
  }
  func.func @transform_1(%arg0: i32) -> (i32, i32) {
    %c0_i32 = arith.constant 0 : i32
    %c0_i32_0 = arith.constant 0 : i32
    %c0_i32_1 = arith.constant 0 : i32
    return %c0_i32, %c0_i32_0 : i32, i32
  }
  func.func @transform_2(%arg0: i32) -> (i32, i32) {
    %c0_i32 = arith.constant 0 : i32
    %c0_i32_0 = arith.constant 0 : i32
    %c0_i32_1 = arith.constant 0 : i32
    return %c0_i32, %c0_i32_0 : i32, i32
  }
  func.func @transform_3(%arg0: i32) -> (i32, i32, i32) {
    %c0_i32 = arith.constant 0 : i32
    %c0_i32_0 = arith.constant 0 : i32
    %c0_i32_1 = arith.constant 0 : i32
    return %arg0, %c0_i32, %c0_i32_0 : i32, i32, i32
  }
}

</mosaic_0001>

<llo_original>
// kernel: tpu_custom_call.1
$region0: #{tpu_custom_call.1}
  #allocation0 [shape = 'u32[]', space=smem, size = 0x4, offset = 0x4, fixed_abs, tag = 'smem constant byte address 0x4 - core index']
  #allocation1 [shape = 'u32[72,128]{1,0:T(1,128)}', space=vmem, size = 0x9000, scoped, tag = 'internal scratch']
  #allocation2 [shape = 'f32[1,1]{1,0:T(1,128)S(6)}', space=smem, size = 0x200, scoped, tag = 'scoped memory for tpu_custom_call.1']
  %s0 = inlined_call_operand.vmem [shape: f32[128,32], index: 0, kind: input, shape index: {}]
  %s1 = inlined_call_operand.vmem [shape: f32[1,32], index: 1, kind: input, shape index: {}]
  %s2 = inlined_call_operand.<no memory space> [shape: f32[1,1], index: 2, kind: input, shape index: {}]
  %s3 = inlined_call_operand.hbm [shape: f32[1,1,128], index: 3, kind: output, shape index: {}]
  %s4 = sld [smem:[#allocation0]]
  $region22: #{tpu_custom_call.1} parent=0
    _
  %s6 = ssub.s32 1, %s4
  %s7 = scalar_select 0, %s6, %s4
  %8 = sst [smem:[#allocation2]] %s2
  $region1: #{tpu_custom_call.1} parent=0
    #allocation3 [shape = 'u8[512]{0}', space=vmem, size = 0x400, scoped, tag = 'output window, operand 0, single buffered']
    #allocation4 [shape = 's32[1]{0}', space=sflag, size = 0x4, scoped, tag = 'scoped memory for tpu_custom_call.1']
    %9 = vsyncpa [#allocation4], 0
    // Predicated region
    $region2: #{tpu_custom_call.1} parent=1 // pred_check
      _
    $region3: #{tpu_custom_call.1} parent=1 // pred_check_branch
      %11 = sbr.rel (0) target = $region5
    $region4: #{tpu_custom_call.1} parent=1 // pred_region
      _
    $region5: #{tpu_custom_call.1} parent=1 // pred_fallthru
      _
    // Predicated region
    $region6: #{tpu_custom_call.1} parent=1 // pred_check
      _
    $region7: #{tpu_custom_call.1} parent=1 // pred_check_branch
      %13 = sbr.rel (0) target = $region9
    $region8: #{tpu_custom_call.1} parent=1 // pred_region
      _
    $region9: #{tpu_custom_call.1} parent=1 // pred_fallthru
      _
    // Predicated region
    $region10: #{tpu_custom_call.1} parent=1 // pred_check
      _
    $region11: #{tpu_custom_call.1} parent=1 // pred_check_branch
      %15 = sbr.rel (0) target = $region13
    $region12: #{tpu_custom_call.1} parent=1 // pred_region
      _
    $region13: #{tpu_custom_call.1} parent=1 // pred_fallthru
      _
    %v16 = vld [vmem:[%s1] sm:$0x1]
    %s17 = sld [smem:[#allocation2]]
    %v18 = vld [vmem:[%s0] sm:$0xff]
    %v19 = vld [vmem:[%s0 + $0x8] sm:$0xff]
    %v20 = vld [vmem:[%s0 + $0x10] sm:$0xff]
    %v21 = vld [vmem:[%s0 + $0x18] sm:$0xff]
    %v22 = vld [vmem:[%s0 + $0x20] sm:$0xff]
    %v23 = vld [vmem:[%s0 + $0x28] sm:$0xff]
    %v24 = vld [vmem:[%s0 + $0x30] sm:$0xff]
    %v25 = vld [vmem:[%s0 + $0x38] sm:$0xff]
    %v26 = vld [vmem:[%s0 + $0x40] sm:$0xff]
    %v27 = vld [vmem:[%s0 + $0x48] sm:$0xff]
    %v28 = vld [vmem:[%s0 + $0x50] sm:$0xff]
    %v29 = vld [vmem:[%s0 + $0x58] sm:$0xff]
    %v30 = vld [vmem:[%s0 + $0x60] sm:$0xff]
    %v31 = vld [vmem:[%s0 + $0x68] sm:$0xff]
    %v32 = vld [vmem:[%s0 + $0x70] sm:$0xff]
    %v33 = vld [vmem:[%s0 + $0x78] sm:$0xff]
    %v35 = vperm.slane %v16, 0
    %v37 = vmul.f32 %v18, %v35
    %v38 = vmul.f32 %v19, %v35
    %v39 = vmul.f32 %v20, %v35
    %v40 = vmul.f32 %v21, %v35
    %v41 = vmul.f32 %v22, %v35
    %v42 = vmul.f32 %v23, %v35
    %v43 = vmul.f32 %v24, %v35
    %v44 = vmul.f32 %v25, %v35
    %v45 = vmul.f32 %v26, %v35
    %v46 = vmul.f32 %v27, %v35
    %v47 = vmul.f32 %v28, %v35
    %v48 = vmul.f32 %v29, %v35
    %v49 = vmul.f32 %v30, %v35
    %v50 = vmul.f32 %v31, %v35
    %v51 = vmul.f32 %v32, %v35
    %v52 = vmul.f32 %v33, %v35
    %vm53 = vcmask 261120
    %v54 = vsel %vm53, %v37, 0.0
    %55 = vadd.xlane.f32.xlu0 %v54
    %v56 = vpop.xlane.xlu0 %55
    %v57 = vsel %vm53, %v38, 0.0
    %58 = vadd.xlane.f32.xlu0 %v57
    %v59 = vpop.xlane.xlu0 %58
    %v60 = vsel %vm53, %v39, 0.0
    %61 = vadd.xlane.f32.xlu0 %v60
    %v62 = vpop.xlane.xlu0 %61
    %v63 = vsel %vm53, %v40, 0.0
    %64 = vadd.xlane.f32.xlu0 %v63
    %v65 = vpop.xlane.xlu0 %64
    %v66 = vsel %vm53, %v41, 0.0
    %67 = vadd.xlane.f32.xlu0 %v66
    %v68 = vpop.xlane.xlu0 %67
    %v69 = vsel %vm53, %v42, 0.0
    %70 = vadd.xlane.f32.xlu0 %v69
    %v71 = vpop.xlane.xlu0 %70
    %v72 = vsel %vm53, %v43, 0.0
    %73 = vadd.xlane.f32.xlu0 %v72
    %v74 = vpop.xlane.xlu0 %73
    %v75 = vsel %vm53, %v44, 0.0
    %76 = vadd.xlane.f32.xlu0 %v75
    %v77 = vpop.xlane.xlu0 %76
    %v78 = vsel %vm53, %v45, 0.0
    %79 = vadd.xlane.f32.xlu0 %v78
    %v80 = vpop.xlane.xlu0 %79
    %v81 = vsel %vm53, %v46, 0.0
    %82 = vadd.xlane.f32.xlu0 %v81
    %v83 = vpop.xlane.xlu0 %82
    %v84 = vsel %vm53, %v47, 0.0
    %85 = vadd.xlane.f32.xlu0 %v84
    %v86 = vpop.xlane.xlu0 %85
    %v87 = vsel %vm53, %v48, 0.0
    %88 = vadd.xlane.f32.xlu0 %v87
    %v89 = vpop.xlane.xlu0 %88
    %v90 = vsel %vm53, %v49, 0.0
    %91 = vadd.xlane.f32.xlu0 %v90
    %v92 = vpop.xlane.xlu0 %91
    %v93 = vsel %vm53, %v50, 0.0
    %94 = vadd.xlane.f32.xlu0 %v93
    %v95 = vpop.xlane.xlu0 %94
    %v96 = vsel %vm53, %v51, 0.0
    %97 = vadd.xlane.f32.xlu0 %v96
    %v98 = vpop.xlane.xlu0 %97
    %v99 = vsel %vm53, %v52, 0.0
    %100 = vadd.xlane.f32.xlu0 %v99
    %v101 = vpop.xlane.xlu0 %100
    %v102 = vstv %s17
    %v103 = vadd.f32 %v56, %v102
    %v104 = vadd.f32 %v59, %v102
    %v105 = vadd.f32 %v62, %v102
    %v106 = vadd.f32 %v65, %v102
    %v107 = vadd.f32 %v68, %v102
    %v108 = vadd.f32 %v71, %v102
    %v109 = vadd.f32 %v74, %v102
    %v110 = vadd.f32 %v77, %v102
    %v111 = vadd.f32 %v80, %v102
    %v112 = vadd.f32 %v83, %v102
    %v113 = vadd.f32 %v86, %v102
    %v114 = vadd.f32 %v89, %v102
    %v115 = vadd.f32 %v92, %v102
    %v116 = vadd.f32 %v95, %v102
    %v117 = vadd.f32 %v98, %v102
    %v118 = vadd.f32 %v101, %v102
    %v119 = vxor.u32 %v103, 2147483648
    %v120 = vxor.u32 %v104, 2147483648
    %v121 = vxor.u32 %v105, 2147483648
    %v122 = vxor.u32 %v106, 2147483648
    %v123 = vxor.u32 %v107, 2147483648
    %v124 = vxor.u32 %v108, 2147483648
    %v125 = vxor.u32 %v109, 2147483648
    %v126 = vxor.u32 %v110, 2147483648
    %v127 = vxor.u32 %v111, 2147483648
    %v128 = vxor.u32 %v112, 2147483648
    %v129 = vxor.u32 %v113, 2147483648
    %v130 = vxor.u32 %v114, 2147483648
    %v131 = vxor.u32 %v115, 2147483648
    %v132 = vxor.u32 %v116, 2147483648
    %v133 = vxor.u32 %v117, 2147483648
    %v134 = vxor.u32 %v118, 2147483648
    %v135 = vmul.f32 %v119, 1.442695
    %v136 = vpow.pop %v135
    %v137 = vmul.f32 %v120, 1.442695
    %v138 = vpow.pop %v137
    %v139 = vmul.f32 %v121, 1.442695
    %v140 = vpow.pop %v139
    %v141 = vmul.f32 %v122, 1.442695
    %v142 = vpow.pop %v141
    %v143 = vmul.f32 %v123, 1.442695
    %v144 = vpow.pop %v143
    %v145 = vmul.f32 %v124, 1.442695
    %v146 = vpow.pop %v145
    %v147 = vmul.f32 %v125, 1.442695
    %v148 = vpow.pop %v147
    %v149 = vmul.f32 %v126, 1.442695
    %v150 = vpow.pop %v149
    %v151 = vmul.f32 %v127, 1.442695
    %v152 = vpow.pop %v151
    %v153 = vmul.f32 %v128, 1.442695
    %v154 = vpow.pop %v153
    %v155 = vmul.f32 %v129, 1.442695
    %v156 = vpow.pop %v155
    %v157 = vmul.f32 %v130, 1.442695
    %v158 = vpow.pop %v157
    %v159 = vmul.f32 %v131, 1.442695
    %v160 = vpow.pop %v159
    %v161 = vmul.f32 %v132, 1.442695
    %v162 = vpow.pop %v161
    %v163 = vmul.f32 %v133, 1.442695
    %v164 = vpow.pop %v163
    %v165 = vmul.f32 %v134, 1.442695
    %v166 = vpow.pop %v165
    %v167 = vadd.f32 %v136, 1.0
    %v168 = vadd.f32 %v138, 1.0
    %v169 = vadd.f32 %v140, 1.0
    %v170 = vadd.f32 %v142, 1.0
    %v171 = vadd.f32 %v144, 1.0
    %v172 = vadd.f32 %v146, 1.0
    %v173 = vadd.f32 %v148, 1.0
    %v174 = vadd.f32 %v150, 1.0
    %v175 = vadd.f32 %v152, 1.0
    %v176 = vadd.f32 %v154, 1.0
    %v177 = vadd.f32 %v156, 1.0
    %v178 = vadd.f32 %v158, 1.0
    %v179 = vadd.f32 %v160, 1.0
    %v180 = vadd.f32 %v162, 1.0
    %v181 = vadd.f32 %v164, 1.0
    %v182 = vadd.f32 %v166, 1.0
    %v183 = vrcp.pop %v167
    %v184 = vmul.f32 %v167, %v183
    %v185 = vsub.f32 1.0, %v184
    %v186 = vmul.f32 %v183, %v185
    %v187 = vadd.f32 %v183, %v186
    %vm188 = vweird.f32 %v167
    %vm189 = vweird.f32 %v183
    %vm190 = vmor %vm188, %vm189
    %v191 = vsel %vm190, %v183, %v187
    %v192 = vand.u32 2147483647, %v167
    %vm193 = vcmp.eq.f32.partialorder %v192, 8.507059e+37
    %v194 = vand.u32 %v167, 2147483648
    %v195 = vor.u32 1.1754944e-38, %v194
    %v196 = vsel %vm193, %v195, %v191
    %v197 = vmul.f32 1.0, %v196
    %v198 = vrcp.pop %v168
    %v199 = vmul.f32 %v168, %v198
    %v200 = vsub.f32 1.0, %v199
    %v201 = vmul.f32 %v198, %v200
    %v202 = vadd.f32 %v198, %v201
    %vm203 = vweird.f32 %v168
    %vm204 = vweird.f32 %v198
    %vm205 = vmor %vm203, %vm204
    %v206 = vsel %vm205, %v198, %v202
    %v207 = vand.u32 2147483647, %v168
    %vm208 = vcmp.eq.f32.partialorder %v207, 8.507059e+37
    %v209 = vand.u32 %v168, 2147483648
    %v210 = vor.u32 1.1754944e-38, %v209
    %v211 = vsel %vm208, %v210, %v206
    %v212 = vmul.f32 1.0, %v211
    %v213 = vrcp.pop %v169
    %v214 = vmul.f32 %v169, %v213
    %v215 = vsub.f32 1.0, %v214
    %v216 = vmul.f32 %v213, %v215
    %v217 = vadd.f32 %v213, %v216
    %vm218 = vweird.f32 %v169
    %vm219 = vweird.f32 %v213
    %vm220 = vmor %vm218, %vm219
    %v221 = vsel %vm220, %v213, %v217
    %v222 = vand.u32 2147483647, %v169
    %vm223 = vcmp.eq.f32.partialorder %v222, 8.507059e+37
    %v224 = vand.u32 %v169, 2147483648
    %v225 = vor.u32 1.1754944e-38, %v224
    %v226 = vsel %vm223, %v225, %v221
    %v227 = vmul.f32 1.0, %v226
    %v228 = vrcp.pop %v170
    %v229 = vmul.f32 %v170, %v228
    %v230 = vsub.f32 1.0, %v229
    %v231 = vmul.f32 %v228, %v230
    %v232 = vadd.f32 %v228, %v231
    %vm233 = vweird.f32 %v170
    %vm234 = vweird.f32 %v228
    %vm235 = vmor %vm233, %vm234
    %v236 = vsel %vm235, %v228, %v232
    %v237 = vand.u32 2147483647, %v170
    %vm238 = vcmp.eq.f32.partialorder %v237, 8.507059e+37
    %v239 = vand.u32 %v170, 2147483648
    %v240 = vor.u32 1.1754944e-38, %v239
    %v241 = vsel %vm238, %v240, %v236
    %v242 = vmul.f32 1.0, %v241
    %v243 = vrcp.pop %v171
    %v244 = vmul.f32 %v171, %v243
    %v245 = vsub.f32 1.0, %v244
    %v246 = vmul.f32 %v243, %v245
    %v247 = vadd.f32 %v243, %v246
    %vm248 = vweird.f32 %v171
    %vm249 = vweird.f32 %v243
    %vm250 = vmor %vm248, %vm249
    %v251 = vsel %vm250, %v243, %v247
    %v252 = vand.u32 2147483647, %v171
    %vm253 = vcmp.eq.f32.partialorder %v252, 8.507059e+37
    %v254 = vand.u32 %v171, 2147483648
    %v255 = vor.u32 1.1754944e-38, %v254
    %v256 = vsel %vm253, %v255, %v251
    %v257 = vmul.f32 1.0, %v256
    %v258 = vrcp.pop %v172
    %v259 = vmul.f32 %v172, %v258
    %v260 = vsub.f32 1.0, %v259
    %v261 = vmul.f32 %v258, %v260
    %v262 = vadd.f32 %v258, %v261
    %vm263 = vweird.f32 %v172
    %vm264 = vweird.f32 %v258
    %vm265 = vmor %vm263, %vm264
    %v266 = vsel %vm265, %v258, %v262
    %v267 = vand.u32 2147483647, %v172
    %vm268 = vcmp.eq.f32.partialorder %v267, 8.507059e+37
    %v269 = vand.u32 %v172, 2147483648
    %v270 = vor.u32 1.1754944e-38, %v269
    %v271 = vsel %vm268, %v270, %v266
    %v272 = vmul.f32 1.0, %v271
    %v273 = vrcp.pop %v173
    %v274 = vmul.f32 %v173, %v273
    %v275 = vsub.f32 1.0, %v274
    %v276 = vmul.f32 %v273, %v275
    %v277 = vadd.f32 %v273, %v276
    %vm278 = vweird.f32 %v173
    %vm279 = vweird.f32 %v273
    %vm280 = vmor %vm278, %vm279
    %v281 = vsel %vm280, %v273, %v277
    %v282 = vand.u32 2147483647, %v173
    %vm283 = vcmp.eq.f32.partialorder %v282, 8.507059e+37
    %v284 = vand.u32 %v173, 2147483648
    %v285 = vor.u32 1.1754944e-38, %v284
    %v286 = vsel %vm283, %v285, %v281
    %v287 = vmul.f32 1.0, %v286
    %v288 = vrcp.pop %v174
    %v289 = vmul.f32 %v174, %v288
    %v290 = vsub.f32 1.0, %v289
    %v291 = vmul.f32 %v288, %v290
    %v292 = vadd.f32 %v288, %v291
    %vm293 = vweird.f32 %v174
    %vm294 = vweird.f32 %v288
    %vm295 = vmor %vm293, %vm294
    %v296 = vsel %vm295, %v288, %v292
    %v297 = vand.u32 2147483647, %v174
    %vm298 = vcmp.eq.f32.partialorder %v297, 8.507059e+37
    %v299 = vand.u32 %v174, 2147483648
    %v300 = vor.u32 1.1754944e-38, %v299
    %v301 = vsel %vm298, %v300, %v296
    %v302 = vmul.f32 1.0, %v301
    %v303 = vrcp.pop %v175
    %v304 = vmul.f32 %v175, %v303
    %v305 = vsub.f32 1.0, %v304
    %v306 = vmul.f32 %v303, %v305
    %v307 = vadd.f32 %v303, %v306
    %vm308 = vweird.f32 %v175
    %vm309 = vweird.f32 %v303
    %vm310 = vmor %vm308, %vm309
    %v311 = vsel %vm310, %v303, %v307
    %v312 = vand.u32 2147483647, %v175
    %vm313 = vcmp.eq.f32.partialorder %v312, 8.507059e+37
    %v314 = vand.u32 %v175, 2147483648
    %v315 = vor.u32 1.1754944e-38, %v314
    %v316 = vsel %vm313, %v315, %v311
    %v317 = vmul.f32 1.0, %v316
    %v318 = vrcp.pop %v176
    %v319 = vmul.f32 %v176, %v318
    %v320 = vsub.f32 1.0, %v319
    %v321 = vmul.f32 %v318, %v320
    %v322 = vadd.f32 %v318, %v321
    %vm323 = vweird.f32 %v176
    %vm324 = vweird.f32 %v318
    %vm325 = vmor %vm323, %vm324
    %v326 = vsel %vm325, %v318, %v322
    %v327 = vand.u32 2147483647, %v176
    %vm328 = vcmp.eq.f32.partialorder %v327, 8.507059e+37
    %v329 = vand.u32 %v176, 2147483648
    %v330 = vor.u32 1.1754944e-38, %v329
    %v331 = vsel %vm328, %v330, %v326
    %v332 = vmul.f32 1.0, %v331
    %v333 = vrcp.pop %v177
    %v334 = vmul.f32 %v177, %v333
    %v335 = vsub.f32 1.0, %v334
    %v336 = vmul.f32 %v333, %v335
    %v337 = vadd.f32 %v333, %v336
    %vm338 = vweird.f32 %v177
    %vm339 = vweird.f32 %v333
    %vm340 = vmor %vm338, %vm339
    %v341 = vsel %vm340, %v333, %v337
    %v342 = vand.u32 2147483647, %v177
    %vm343 = vcmp.eq.f32.partialorder %v342, 8.507059e+37
    %v344 = vand.u32 %v177, 2147483648
    %v345 = vor.u32 1.1754944e-38, %v344
    %v346 = vsel %vm343, %v345, %v341
    %v347 = vmul.f32 1.0, %v346
    %v348 = vrcp.pop %v178
    %v349 = vmul.f32 %v178, %v348
    %v350 = vsub.f32 1.0, %v349
    %v351 = vmul.f32 %v348, %v350
    %v352 = vadd.f32 %v348, %v351
    %vm353 = vweird.f32 %v178
    %vm354 = vweird.f32 %v348
    %vm355 = vmor %vm353, %vm354
    %v356 = vsel %vm355, %v348, %v352
    %v357 = vand.u32 2147483647, %v178
    %vm358 = vcmp.eq.f32.partialorder %v357, 8.507059e+37
    %v359 = vand.u32 %v178, 2147483648
    %v360 = vor.u32 1.1754944e-38, %v359
    %v361 = vsel %vm358, %v360, %v356
    %v362 = vmul.f32 1.0, %v361
    %v363 = vrcp.pop %v179
    %v364 = vmul.f32 %v179, %v363
    %v365 = vsub.f32 1.0, %v364
    %v366 = vmul.f32 %v363, %v365
    %v367 = vadd.f32 %v363, %v366
    %vm368 = vweird.f32 %v179
    %vm369 = vweird.f32 %v363
    %vm370 = vmor %vm368, %vm369
    %v371 = vsel %vm370, %v363, %v367
    %v372 = vand.u32 2147483647, %v179
    %vm373 = vcmp.eq.f32.partialorder %v372, 8.507059e+37
    %v374 = vand.u32 %v179, 2147483648
    %v375 = vor.u32 1.1754944e-38, %v374
    %v376 = vsel %vm373, %v375, %v371
    %v377 = vmul.f32 1.0, %v376
    %v378 = vrcp.pop %v180
    %v379 = vmul.f32 %v180, %v378
    %v380 = vsub.f32 1.0, %v379
    %v381 = vmul.f32 %v378, %v380
    %v382 = vadd.f32 %v378, %v381
    %vm383 = vweird.f32 %v180
    %vm384 = vweird.f32 %v378
    %vm385 = vmor %vm383, %vm384
    %v386 = vsel %vm385, %v378, %v382
    %v387 = vand.u32 2147483647, %v180
    %vm388 = vcmp.eq.f32.partialorder %v387, 8.507059e+37
    %v389 = vand.u32 %v180, 2147483648
    %v390 = vor.u32 1.1754944e-38, %v389
    %v391 = vsel %vm388, %v390, %v386
    %v392 = vmul.f32 1.0, %v391
    %v393 = vrcp.pop %v181
    %v394 = vmul.f32 %v181, %v393
    %v395 = vsub.f32 1.0, %v394
    %v396 = vmul.f32 %v393, %v395
    %v397 = vadd.f32 %v393, %v396
    %vm398 = vweird.f32 %v181
    %vm399 = vweird.f32 %v393
    %vm400 = vmor %vm398, %vm399
    %v401 = vsel %vm400, %v393, %v397
    %v402 = vand.u32 2147483647, %v181
    %vm403 = vcmp.eq.f32.partialorder %v402, 8.507059e+37
    %v404 = vand.u32 %v181, 2147483648
    %v405 = vor.u32 1.1754944e-38, %v404
    %v406 = vsel %vm403, %v405, %v401
    %v407 = vmul.f32 1.0, %v406
    %v408 = vrcp.pop %v182
    %v409 = vmul.f32 %v182, %v408
    %v410 = vsub.f32 1.0, %v409
    %v411 = vmul.f32 %v408, %v410
    %v412 = vadd.f32 %v408, %v411
    %vm413 = vweird.f32 %v182
    %vm414 = vweird.f32 %v408
    %vm415 = vmor %vm413, %vm414
    %v416 = vsel %vm415, %v408, %v412
    %v417 = vand.u32 2147483647, %v182
    %vm418 = vcmp.eq.f32.partialorder %v417, 8.507059e+37
    %v419 = vand.u32 %v182, 2147483648
    %v420 = vor.u32 1.1754944e-38, %v419
    %v421 = vsel %vm418, %v420, %v416
    %v422 = vmul.f32 1.0, %v421
    %v439 = vlaneseq
    %v440 = vand.u32 %v439, 127
    %v441 = vperm.slane %v197, %v440
    %v442 = vadd.s32 %v440, 4294967288
    %v443 = vperm.slane %v212, %v442
    %vm444 = vcmask 130112
    %v445 = vsel %vm444, %v443, %v441
    %v446 = vadd.s32 %v440, 4294967280
    %v447 = vperm.slane %v227, %v446
    %vm448 = vcmask 195712
    %v449 = vsel %vm448, %v447, %v445
    %v450 = vadd.s32 %v440, 4294967272
    %v451 = vperm.slane %v242, %v450
    %vm452 = vcmask 261312
    %v453 = vsel %vm452, %v451, %v449
    %v454 = vadd.s32 %v440, 4294967264
    %v455 = vperm.slane %v257, %v454
    %vm456 = vcmask 326912
    %v457 = vsel %vm456, %v455, %v453
    %v458 = vadd.s32 %v440, 4294967256
    %v459 = vperm.slane %v272, %v458
    %vm460 = vcmask 392512
    %v461 = vsel %vm460, %v459, %v457
    %v462 = vadd.s32 %v440, 4294967248
    %v463 = vperm.slane %v287, %v462
    %vm464 = vcmask 458112
    %v465 = vsel %vm464, %v463, %v461
    %v466 = vadd.s32 %v440, 4294967240
    %v467 = vperm.slane %v302, %v466
    %vm468 = vcmask 523712
    %v469 = vsel %vm468, %v467, %v465
    %v470 = vadd.s32 %v440, 4294967232
    %v471 = vperm.slane %v317, %v470
    %vm472 = vcmask 589312
    %v473 = vsel %vm472, %v471, %v469
    %v474 = vadd.s32 %v440, 4294967224
    %v475 = vperm.slane %v332, %v474
    %vm476 = vcmask 654912
    %v477 = vsel %vm476, %v475, %v473
    %v478 = vadd.s32 %v440, 4294967216
    %v479 = vperm.slane %v347, %v478
    %vm480 = vcmask 720512
    %v481 = vsel %vm480, %v479, %v477
    %v482 = vadd.s32 %v440, 4294967208
    %v483 = vperm.slane %v362, %v482
    %vm484 = vcmask 786112
    %v485 = vsel %vm484, %v483, %v481
    %v486 = vadd.s32 %v440, 4294967200
    %v487 = vperm.slane %v377, %v486
    %vm488 = vcmask 851712
    %v489 = vsel %vm488, %v487, %v485
    %v490 = vadd.s32 %v440, 4294967192
    %v491 = vperm.slane %v392, %v490
    %vm492 = vcmask 917312
    %v493 = vsel %vm492, %v491, %v489
    %v494 = vadd.s32 %v440, 4294967184
    %v495 = vperm.slane %v407, %v494
    %vm496 = vcmask 982912
    %v497 = vsel %vm496, %v495, %v493
    %v498 = vadd.s32 %v440, 4294967176
    %v499 = vperm.slane %v422, %v498
    %vm500 = vcmask 1048512
    %v501 = vsel %vm500, %v499, %v497
    %503 = vst [vmem:[#allocation3] sm:$0x1] %v501
    // Predicated region
    $region14: #{tpu_custom_call.1} parent=1 // pred_check
      _
    $region15: #{tpu_custom_call.1} parent=1 // pred_check_branch
      %505 = sbr.rel (0) target = $region17
    $region16: #{tpu_custom_call.1} parent=1 // pred_region
      %507 = vsyncadd [#allocation4], 0
      %s509 = sshll.u32 [#allocation3], 4
      %s510 = int_to_ptr.vmem [resolvable:$true] %s509
      %s511 = sshll.u32 %s3, 4
      %s512 = int_to_ptr.hbm [resolvable:$true] %s511
      %514 = dma.vmem_to_hbm [thread:$0]  %s510, 16, %s512, [#allocation4]
    $region17: #{tpu_custom_call.1} parent=1 // pred_fallthru
      _
    // Predicated region
    $region18: #{tpu_custom_call.1} parent=1 // pred_check
      _
    $region19: #{tpu_custom_call.1} parent=1 // pred_check_branch
      %516 = sbr.rel (0) target = $region21
    $region20: #{tpu_custom_call.1} parent=1 // pred_region
      %518 = dma.done [#allocation4], 16
    $region21: #{tpu_custom_call.1} parent=1 // pred_fallthru
      _
    %519 = vsyncpa [#allocation4], 1

</llo_original>
